<compile_context>
chip_gen: v7x
topology: tpu7x:2x2x1
jax: 0.10.0
libtpu: 0.0.40
codegen_flags: <defaults>
</compile_context>

<pallas_src>
import jax
import jax.numpy as jnp
from jax.experimental import pallas as pl
from jax.experimental.pallas import tpu as pltpu


def _make_kernel(HW, W, Ho, C):
    HoW = Ho * W

    def kernel(x_ref, w_ref, b_ref, o_ref):
        # x_ref: (TB, H*W) VMEM -- one lane-dense row per batch element.
        # w_ref: (C, 3) SMEM, b_ref: (C,) SMEM (scalar reads only).
        # o_ref: (TB, C*Ho*W) VMEM -- flattened PyTorch layout (c, h, w).
        #
        # The (3,1) conv only mixes along H, so tap k of flat output index
        # j = h*W + w is x_flat[j + k*W]: one full-row load + two lane rolls
        # (positive shifts; roll by HW - k*W == roll by -k*W).
        x0 = x_ref[...].astype(jnp.float32)              # load + upcast once
        x1 = pltpu.roll(x0, (HW - W) % HW, 1)            # x1[:, j] = x0[:, j + W]
        x2 = pltpu.roll(x0, (HW - 2 * W) % HW, 1)        # x2[:, j] = x0[:, j + 2W]

        for c in range(C):  # C is small: static unroll, scalar weights from SMEM
            yc = (w_ref[c, 0] * x0 + w_ref[c, 1] * x1 + w_ref[c, 2] * x2
                  + b_ref[c])
            # Only the first Ho*W lanes are valid (no H wrap-around there);
            # store the channel directly into its slice of the flat out row.
            o_ref[:, pl.ds(c * HoW, HoW)] = yc[:, :HoW].astype(o_ref.dtype)

    return kernel


def _choose_batch_tile(N, HW, F, itemsize):
    """Batch tile: VMEM-budgeted, >= 2 grid steps for larger N (v7x dual TC)."""
    if N < 16:
        return N  # one block; per-step overhead dominates at tiny N
    # Double-buffered input + output tiles ~ 2*(HW+F)*TB*itemsize bytes; keep
    # them within ~8 MiB so buffers + f32 temps fit every gen's scoped VMEM.
    budget_bytes = 8 * 1024 * 1024
    rows_by_budget = max(8, budget_bytes // (2 * (HW + F) * itemsize))
    # At least two grid steps so the "parallel" batch axis can be sharded
    # across both TensorCores on v7x.
    rows_for_two_steps = ((N + 1) // 2 + 7) // 8 * 8
    tb = min(rows_by_budget, rows_for_two_steps, 2048)
    return max(8, (tb // 8) * 8)


def _pallas_forward(x_flat, w2d, b1d, *, W, Ho, C):
    N, HW = x_flat.shape
    HoW = Ho * W
    F = C * HoW

    TB = _choose_batch_tile(N, HW, F, max(x_flat.dtype.itemsize, 4))
    grid = (pl.cdiv(N, TB),)

    kernel = _make_kernel(HW, W, Ho, C)
    return pl.pallas_call(
        kernel,
        out_shape=jax.ShapeDtypeStruct((N, F), x_flat.dtype),
        grid_spec=pltpu.PrefetchScalarGridSpec(
            num_scalar_prefetch=0,
            grid=grid,
            in_specs=[
                pl.BlockSpec((TB, HW), lambda i: (i, 0)),
                pl.BlockSpec(memory_space=pltpu.MemorySpace.SMEM),  # weight
                pl.BlockSpec(memory_space=pltpu.MemorySpace.SMEM),  # bias
            ],
            out_specs=pl.BlockSpec((TB, F), lambda i: (i, 0)),
        ),
        compiler_params=pltpu.CompilerParams(
            dimension_semantics=("parallel",),
            vmem_limit_bytes=32 * 1024 * 1024,
        ),
    )(x_flat, w2d, b1d)


def cf_conv_linear_net_forward(x_nchw, weight, bias):
    """x_nchw: (N, 1, H, W); weight: (C, 1, 3, 1); bias: (C,) -> (N, C*(H-2)*W)."""
    N, Cin, H, W = x_nchw.shape
    assert Cin == 1, "module is defined with in_channels=1"
    assert H >= 3, "kernel height 3 needs H >= 3"
    C = weight.shape[0]
    Ho = H - 2

    x_flat = x_nchw.reshape(N, H * W)               # lane-dense, contiguous
    w2d = weight.reshape(C, 3).astype(jnp.float32)  # (C_out, kH) scalars
    b1d = bias.reshape(C).astype(jnp.float32)

    return _pallas_forward(x_flat, w2d, b1d, W=W, Ho=Ho, C=C)


def _reference_forward(x_nchw, weight, bias):
    # Pure-JAX reference: Conv2d(1, C, (3,1)), stride 1, no padding, flatten.
    N, _, H, W = x_nchw.shape
    C = weight.shape[0]
    Ho = H - 2
    x = x_nchw[:, 0].astype(jnp.float32)
    w = weight.reshape(C, 3).astype(jnp.float32)
    b = bias.astype(jnp.float32)
    out = (w[None, :, 0, None, None] * x[:, None, 0:Ho, :]
           + w[None, :, 1, None, None] * x[:, None, 1:Ho + 1, :]
           + w[None, :, 2, None, None] * x[:, None, 2:Ho + 2, :]
           + b[None, :, None, None])
    return out.reshape(N, C * Ho * W).astype(x_nchw.dtype)


if __name__ == "__main__":
    key = jax.random.PRNGKey(0)
    k_x, k_w, k_b = jax.random.split(key, 3)

    N, H, W = 2, 16, 16
    hidden_channels = 4

    x = jax.random.normal(k_x, (N, 1, H, W), dtype=jnp.float32)

    # Deterministic parameter init (kaiming-uniform-ish, like PyTorch Conv2d).
    fan_in = 1 * 3 * 1
    bound = 1.0 / (fan_in ** 0.5)
    weight = jax.random.uniform(k_w, (hidden_channels, 1, 3, 1),
                                dtype=jnp.float32, minval=-bound, maxval=bound)
    bias = jax.random.uniform(k_b, (hidden_channels,),
                              dtype=jnp.float32, minval=-bound, maxval=bound)

    out = cf_conv_linear_net_forward(x, weight, bias)
    out = jax.block_until_ready(out)

    ref = _reference_forward(x, weight, bias)
    assert out.shape == (N, hidden_channels * (H - 2) * W), out.shape
    assert jnp.allclose(out, ref, atol=1e-5, rtol=1e-5), "mismatch vs reference"

    print("KERNEL_OK")
</pallas_src>

<mosaic_0001>
module attributes {stable_mosaic.version = 11 : i64} {
  func.func @kernel(%arg0: i32, %arg1: memref<2x256xf32, #tpu.memory_space<vmem>>, %arg2: memref<4x3xf32, #tpu.memory_space<smem>>, %arg3: memref<4xf32, #tpu.memory_space<smem>>, %arg4: memref<2x896xf32, #tpu.memory_space<vmem>>) attributes {dimension_semantics = [#tpu.dimension_semantics<parallel>], iteration_bounds = array<i64: 1>, scalar_prefetch = 0 : i64, scratch_operands = 0 : i64, tpu.core_type = #tpu.core_type<tc>, window_params = [{transform_indices = @transform_0, window_bounds = array<i64: 2, 256>}, {transform_indices = @transform_1, window_bounds = array<i64: 4, 3>}, {transform_indices = @transform_2, window_bounds = array<i64: 4>}, {transform_indices = @transform_3, window_bounds = array<i64: 2, 896>}]} {
    %c0 = arith.constant 0 : index
    %c0_0 = arith.constant 0 : index
    %0 = vector.load %arg1[%c0, %c0_0] : memref<2x256xf32, #tpu.memory_space<vmem>>, vector<2x256xf32>
    %c240_i32 = arith.constant 240 : i32
    %1 = tpu.dynamic_rotate %0 by %c240_i32 dim 1 : vector<2x256xf32>, i32 -> vector<2x256xf32>
    %c224_i32 = arith.constant 224 : i32
    %2 = tpu.dynamic_rotate %0 by %c224_i32 dim 1 : vector<2x256xf32>, i32 -> vector<2x256xf32>
    %c0_1 = arith.constant 0 : index
    %c0_2 = arith.constant 0 : index
    %3 = memref.load %arg2[%c0_1, %c0_2] : memref<4x3xf32, #tpu.memory_space<smem>>
    %4 = vector.broadcast %3 : f32 to vector<2x256xf32>
    %5 = arith.mulf %4, %0 : vector<2x256xf32>
    %c0_3 = arith.constant 0 : index
    %c1 = arith.constant 1 : index
    %6 = memref.load %arg2[%c0_3, %c1] : memref<4x3xf32, #tpu.memory_space<smem>>
    %7 = vector.broadcast %6 : f32 to vector<2x256xf32>
    %8 = arith.mulf %7, %1 : vector<2x256xf32>
    %9 = arith.addf %5, %8 : vector<2x256xf32>
    %c0_4 = arith.constant 0 : index
    %c2 = arith.constant 2 : index
    %10 = memref.load %arg2[%c0_4, %c2] : memref<4x3xf32, #tpu.memory_space<smem>>
    %11 = vector.broadcast %10 : f32 to vector<2x256xf32>
    %12 = arith.mulf %11, %2 : vector<2x256xf32>
    %13 = arith.addf %9, %12 : vector<2x256xf32>
    %c0_5 = arith.constant 0 : index
    %14 = memref.load %arg3[%c0_5] : memref<4xf32, #tpu.memory_space<smem>>
    %15 = vector.broadcast %14 : f32 to vector<2x256xf32>
    %16 = arith.addf %13, %15 : vector<2x256xf32>
    %17 = vector.extract_strided_slice %16 {offsets = [0, 0], sizes = [2, 224], strides = [1, 1]} : vector<2x256xf32> to vector<2x224xf32>
    %c0_6 = arith.constant 0 : index
    %c0_7 = arith.constant 0 : index
    %18 = vector.load %arg4[%c0_6, %c0_7] : memref<2x896xf32, #tpu.memory_space<vmem>>, vector<2x224xf32>
    tpu.vector_store %arg4[%c0_6, %c0_7], %17 {strides = array<i32>} : memref<2x896xf32, #tpu.memory_space<vmem>>, vector<2x224xf32>,
    %c1_8 = arith.constant 1 : index
    %c0_9 = arith.constant 0 : index
    %19 = memref.load %arg2[%c1_8, %c0_9] : memref<4x3xf32, #tpu.memory_space<smem>>
    %20 = vector.broadcast %19 : f32 to vector<2x256xf32>
    %21 = arith.mulf %20, %0 : vector<2x256xf32>
    %c1_10 = arith.constant 1 : index
    %c1_11 = arith.constant 1 : index
    %22 = memref.load %arg2[%c1_10, %c1_11] : memref<4x3xf32, #tpu.memory_space<smem>>
    %23 = vector.broadcast %22 : f32 to vector<2x256xf32>
    %24 = arith.mulf %23, %1 : vector<2x256xf32>
    %25 = arith.addf %21, %24 : vector<2x256xf32>
    %c1_12 = arith.constant 1 : index
    %c2_13 = arith.constant 2 : index
    %26 = memref.load %arg2[%c1_12, %c2_13] : memref<4x3xf32, #tpu.memory_space<smem>>
    %27 = vector.broadcast %26 : f32 to vector<2x256xf32>
    %28 = arith.mulf %27, %2 : vector<2x256xf32>
    %29 = arith.addf %25, %28 : vector<2x256xf32>
    %c1_14 = arith.constant 1 : index
    %30 = memref.load %arg3[%c1_14] : memref<4xf32, #tpu.memory_space<smem>>
    %31 = vector.broadcast %30 : f32 to vector<2x256xf32>
    %32 = arith.addf %29, %31 : vector<2x256xf32>
    %33 = vector.extract_strided_slice %32 {offsets = [0, 0], sizes = [2, 224], strides = [1, 1]} : vector<2x256xf32> to vector<2x224xf32>
    %c0_15 = arith.constant 0 : index
    %c224 = arith.constant 224 : index
    %34 = vector.load %arg4[%c0_15, %c224] : memref<2x896xf32, #tpu.memory_space<vmem>>, vector<2x224xf32>
    tpu.vector_store %arg4[%c0_15, %c224], %33 {strides = array<i32>} : memref<2x896xf32, #tpu.memory_space<vmem>>, vector<2x224xf32>,
    %c2_16 = arith.constant 2 : index
    %c0_17 = arith.constant 0 : index
    %35 = memref.load %arg2[%c2_16, %c0_17] : memref<4x3xf32, #tpu.memory_space<smem>>
    %36 = vector.broadcast %35 : f32 to vector<2x256xf32>
    %37 = arith.mulf %36, %0 : vector<2x256xf32>
    %c2_18 = arith.constant 2 : index
    %c1_19 = arith.constant 1 : index
    %38 = memref.load %arg2[%c2_18, %c1_19] : memref<4x3xf32, #tpu.memory_space<smem>>
    %39 = vector.broadcast %38 : f32 to vector<2x256xf32>
    %40 = arith.mulf %39, %1 : vector<2x256xf32>
    %41 = arith.addf %37, %40 : vector<2x256xf32>
    %c2_20 = arith.constant 2 : index
    %c2_21 = arith.constant 2 : index
    %42 = memref.load %arg2[%c2_20, %c2_21] : memref<4x3xf32, #tpu.memory_space<smem>>
    %43 = vector.broadcast %42 : f32 to vector<2x256xf32>
    %44 = arith.mulf %43, %2 : vector<2x256xf32>
    %45 = arith.addf %41, %44 : vector<2x256xf32>
    %c2_22 = arith.constant 2 : index
    %46 = memref.load %arg3[%c2_22] : memref<4xf32, #tpu.memory_space<smem>>
    %47 = vector.broadcast %46 : f32 to vector<2x256xf32>
    %48 = arith.addf %45, %47 : vector<2x256xf32>
    %49 = vector.extract_strided_slice %48 {offsets = [0, 0], sizes = [2, 224], strides = [1, 1]} : vector<2x256xf32> to vector<2x224xf32>
    %c0_23 = arith.constant 0 : index
    %c448 = arith.constant 448 : index
    %50 = vector.load %arg4[%c0_23, %c448] : memref<2x896xf32, #tpu.memory_space<vmem>>, vector<2x224xf32>
    tpu.vector_store %arg4[%c0_23, %c448], %49 {strides = array<i32>} : memref<2x896xf32, #tpu.memory_space<vmem>>, vector<2x224xf32>,
    %c3 = arith.constant 3 : index
    %c0_24 = arith.constant 0 : index
    %51 = memref.load %arg2[%c3, %c0_24] : memref<4x3xf32, #tpu.memory_space<smem>>
    %52 = vector.broadcast %51 : f32 to vector<2x256xf32>
    %53 = arith.mulf %52, %0 : vector<2x256xf32>
    %c3_25 = arith.constant 3 : index
    %c1_26 = arith.constant 1 : index
    %54 = memref.load %arg2[%c3_25, %c1_26] : memref<4x3xf32, #tpu.memory_space<smem>>
    %55 = vector.broadcast %54 : f32 to vector<2x256xf32>
    %56 = arith.mulf %55, %1 : vector<2x256xf32>
    %57 = arith.addf %53, %56 : vector<2x256xf32>
    %c3_27 = arith.constant 3 : index
    %c2_28 = arith.constant 2 : index
    %58 = memref.load %arg2[%c3_27, %c2_28] : memref<4x3xf32, #tpu.memory_space<smem>>
    %59 = vector.broadcast %58 : f32 to vector<2x256xf32>
    %60 = arith.mulf %59, %2 : vector<2x256xf32>
    %61 = arith.addf %57, %60 : vector<2x256xf32>
    %c3_29 = arith.constant 3 : index
    %62 = memref.load %arg3[%c3_29] : memref<4xf32, #tpu.memory_space<smem>>
    %63 = vector.broadcast %62 : f32 to vector<2x256xf32>
    %64 = arith.addf %61, %63 : vector<2x256xf32>
    %65 = vector.extract_strided_slice %64 {offsets = [0, 0], sizes = [2, 224], strides = [1, 1]} : vector<2x256xf32> to vector<2x224xf32>
    %c0_30 = arith.constant 0 : index
    %c672 = arith.constant 672 : index
    %66 = vector.load %arg4[%c0_30, %c672] : memref<2x896xf32, #tpu.memory_space<vmem>>, vector<2x224xf32>
    tpu.vector_store %arg4[%c0_30, %c672], %65 {strides = array<i32>} : memref<2x896xf32, #tpu.memory_space<vmem>>, vector<2x224xf32>,
    return
  }
  func.func @transform_0(%arg0: i32) -> (i32, i32) {
    %c0_i32 = arith.constant 0 : i32
    %c0_i32_0 = arith.constant 0 : i32
    return %arg0, %c0_i32 : i32, i32
  }
  func.func @transform_1(%arg0: i32) -> (i32, i32) {
    %c0_i32 = arith.constant 0 : i32
    %c0_i32_0 = arith.constant 0 : i32
    %c0_i32_1 = arith.constant 0 : i32
    return %c0_i32, %c0_i32_0 : i32, i32
  }
  func.func @transform_2(%arg0: i32) -> i32 {
    %c0_i32 = arith.constant 0 : i32
    %c0_i32_0 = arith.constant 0 : i32
    return %c0_i32 : i32
  }
  func.func @transform_3(%arg0: i32) -> (i32, i32) {
    %c0_i32 = arith.constant 0 : i32
    %c0_i32_0 = arith.constant 0 : i32
    return %arg0, %c0_i32 : i32, i32
  }
}

</mosaic_0001>

<llo_original>
// kernel: tpu_custom_call.1
$region0: #{tpu_custom_call.1}
  #allocation0 [shape = 'u32[]', space=smem, size = 0x4, offset = 0x4, fixed_abs, tag = 'smem constant byte address 0x4 - core index']
  #allocation1 [shape = 'u32[144,128]{1,0:T(1,128)}', space=vmem, size = 0x12000, scoped, tag = 'internal scratch']
  %s0 = inlined_call_operand.hbm [shape: f32[2,256], index: 0, kind: input, shape index: {}]
  %s1 = inlined_call_operand.hbm [shape: f32[4,3], index: 1, kind: input, shape index: {}]
  %s2 = inlined_call_operand.vmem [shape: f32[4], index: 2, kind: input, shape index: {}]
  %s3 = inlined_call_operand.hbm [shape: f32[2,896], index: 3, kind: output, shape index: {}]
  %s4 = sld [smem:[#allocation0]]
  $region34: #{tpu_custom_call.1} parent=0
    _
  %s6 = ssub.s32 1, %s4
  %s7 = scalar_select 0, %s6, %s4
  $region1: #{tpu_custom_call.1} parent=0
    #allocation2 [shape = 'u8[2048]{0}', space=vmem, size = 0x800, scoped, tag = 'input window, operand 0, single buffered']
    #allocation3 [shape = 's32[1]{0}', space=sflag, size = 0x4, scoped, tag = 'scoped memory for tpu_custom_call.1']
    #allocation4 [shape = 's32[1]{0}', space=sflag, size = 0x4, scoped, tag = 'scoped memory for tpu_custom_call.1']
    #allocation5 [shape = 's32[1]{0}', space=sflag, size = 0x4, scoped, tag = 'scoped memory for tpu_custom_call.1']
    #allocation6 [shape = 's32[1]{0}', space=sflag, size = 0x4, scoped, tag = 'scoped memory for tpu_custom_call.1']
    #allocation7 [shape = 'u8[2048]{0}', space=smem, size = 0x800, scoped, tag = 'input window, operand 1, single buffered']
    #allocation8 [shape = 'u8[512]{0}', space=smem, size = 0x200, scoped, tag = 'input window, operand 2, single buffered']
    #allocation9 [shape = 'u8[7168]{0}', space=vmem, size = 0x1c00, scoped, tag = 'output window, operand 0, single buffered']
    %8 = vsyncpa [#allocation3], 0
    %9 = vsyncpa [#allocation5], 0
    %10 = vsyncpa [#allocation6], 0
    %11 = vsyncpa [#allocation4], 0
    // Predicated region
    $region2: #{tpu_custom_call.1} parent=1 // pred_check
      _
    $region3: #{tpu_custom_call.1} parent=1 // pred_check_branch
      %13 = sbr.rel (0) target = $region5
    $region4: #{tpu_custom_call.1} parent=1 // pred_region
      %s15 = ssub.s32 64, 64
      %16 = vsyncadd [#allocation3], %s15
      %s18 = sshll.u32 [#allocation2], 4
      %s19 = int_to_ptr.vmem [resolvable:$true] %s18
      %21 = dma.hbm_to_vmem [thread:$0]  %s0, 64, %s19, [#allocation3]
    $region5: #{tpu_custom_call.1} parent=1 // pred_fallthru
      _
    // Predicated region
    $region6: #{tpu_custom_call.1} parent=1 // pred_check
      _
    $region7: #{tpu_custom_call.1} parent=1 // pred_check_branch
      %23 = sbr.rel (0) target = $region9
    $region8: #{tpu_custom_call.1} parent=1 // pred_region
      %s25 = ssub.s32 64, 64
      %26 = vsyncadd [#allocation5], %s25
      %29 = dma.hbm_to_smem %s1, 64, [#allocation7], [#allocation5]
    $region9: #{tpu_custom_call.1} parent=1 // pred_fallthru
      _
    // Predicated region
    $region10: #{tpu_custom_call.1} parent=1 // pred_check
      _
    $region11: #{tpu_custom_call.1} parent=1 // pred_check_branch
      %31 = sbr.rel (0) target = $region13
    $region12: #{tpu_custom_call.1} parent=1 // pred_region
      %s33 = ssub.s32 16, 16
      %34 = vsyncadd [#allocation6], %s33
      %s36 = sshll.u32 %s2, 4
      %s37 = int_to_ptr.vmem [resolvable:$true] %s36
      %39 = dma.vmem_to_smem %s37, 16, [#allocation8], [#allocation6]
    $region13: #{tpu_custom_call.1} parent=1 // pred_fallthru
      _
    // Predicated region
    $region14: #{tpu_custom_call.1} parent=1 // pred_check
      _
    $region15: #{tpu_custom_call.1} parent=1 // pred_check_branch
      %41 = sbr.rel (0) target = $region17
    $region16: #{tpu_custom_call.1} parent=1 // pred_region
      %42 = dma.done [#allocation3], 64
    $region17: #{tpu_custom_call.1} parent=1 // pred_fallthru
      _
    // Predicated region
    $region18: #{tpu_custom_call.1} parent=1 // pred_check
      _
    $region19: #{tpu_custom_call.1} parent=1 // pred_check_branch
      %44 = sbr.rel (0) target = $region21
    $region20: #{tpu_custom_call.1} parent=1 // pred_region
      %45 = dma.done [#allocation5], 64
    $region21: #{tpu_custom_call.1} parent=1 // pred_fallthru
      _
    // Predicated region
    $region22: #{tpu_custom_call.1} parent=1 // pred_check
      _
    $region23: #{tpu_custom_call.1} parent=1 // pred_check_branch
      %47 = sbr.rel (0) target = $region25
    $region24: #{tpu_custom_call.1} parent=1 // pred_region
      %48 = dma.done [#allocation6], 16
    $region25: #{tpu_custom_call.1} parent=1 // pred_fallthru
      _
    %49 = sfence
    %v50 = vld [vmem:[#allocation2] sm:$0xf]
    %v53 = vunpack.c.l.s4 1983009808
    %v54 = vunpack.c.0.s8 %v53
    %v55 = vlaneseq
    %v56 = vshrl.u32 %v55, 7
    %v57 = vsub.s32 %v54, %v56
    %v58 = vrot.slane %v50, %v57
    %v59 = vcombine.high %v58, %v58
    %62 = vrot.lane.b32.xlu0 %v58, 112
    %v63 = vpop.permute.xlu0 %62
    %64 = vrot.lane.b32.xlu0 %v59, 112
    %v65 = vpop.permute.xlu0 %64
    %v66 = vlaneseq
    %v67 = vand.u32 %v66, 127
    %vm68 = vcmp.lt.s32.totalorder %v67, 112
    %v69 = vsel %vm68, %v63, %v65
    %v70 = vsel %vm68, %v65, %v63
    %71 = vrot.lane.b32.xlu0 %v58, 96
    %v72 = vpop.permute.xlu0 %71
    %73 = vrot.lane.b32.xlu0 %v59, 96
    %v74 = vpop.permute.xlu0 %73
    %vm75 = vcmp.lt.s32.totalorder %v67, 96
    %v76 = vsel %vm75, %v72, %v74
    %v77 = vsel %vm75, %v74, %v72
    %s78 = sld [smem:[#allocation7]]
    %v79 = vstv %s78
    %v80 = vmul.f32 %v79, %v50
    %s81 = sld [smem:[#allocation7 + $0x1]]
    %v82 = vstv %s81
    %v83 = vmul.f32 %v82, %v69
    %v84 = vmul.f32 %v82, %v70
    %v87 = vcombine.low %v83, %v84
    %v89 = vunpack.c.l.s4 1983009808
    %v90 = vunpack.c.0.s8 %v89
    %v91 = vlaneseq
    %v92 = vshrl.u32 %v91, 7
    %v93 = vsub.s32 %v90, %v92
    %v94 = vrot.slane %v87, %v93
    %v96 = vadd.f32 %v80, %v94
    %s97 = sld [smem:[#allocation7 + $0x2]]
    %v98 = vstv %s97
    %v99 = vmul.f32 %v98, %v76
    %v100 = vmul.f32 %v98, %v77
    %v103 = vcombine.low %v99, %v100
    %v105 = vunpack.c.l.s4 1983009808
    %v106 = vunpack.c.0.s8 %v105
    %v107 = vlaneseq
    %v108 = vshrl.u32 %v107, 7
    %v109 = vsub.s32 %v106, %v108
    %v110 = vrot.slane %v103, %v109
    %v112 = vadd.f32 %v96, %v110
    %s113 = sld [smem:[#allocation8]]
    %v114 = vstv %s113
    %v115 = vadd.f32 %v112, %v114
    %vm116 = vcmask 1041408
    %vm117 = vcmask 781314
    %vm118 = vmor %vm117, %vm116
    %119 = vst.msk [vmem:[#allocation9] sm:$0xf] %vm118, %v115
    %s120 = sld [smem:[#allocation7 + $0x80]]
    %v121 = vstv %s120
    %v122 = vmul.f32 %v121, %v50
    %s123 = sld [smem:[#allocation7 + $0x81]]
    %v124 = vstv %s123
    %v125 = vmul.f32 %v124, %v69
    %v126 = vmul.f32 %v124, %v70
    %v129 = vcombine.low %v125, %v126
    %v131 = vunpack.c.l.s4 1983009808
    %v132 = vunpack.c.0.s8 %v131
    %v133 = vlaneseq
    %v134 = vshrl.u32 %v133, 7
    %v135 = vsub.s32 %v132, %v134
    %v136 = vrot.slane %v129, %v135
    %v138 = vadd.f32 %v122, %v136
    %s139 = sld [smem:[#allocation7 + $0x82]]
    %v140 = vstv %s139
    %v141 = vmul.f32 %v140, %v76
    %v142 = vmul.f32 %v140, %v77
    %v145 = vcombine.low %v141, %v142
    %v147 = vunpack.c.l.s4 1983009808
    %v148 = vunpack.c.0.s8 %v147
    %v149 = vlaneseq
    %v150 = vshrl.u32 %v149, 7
    %v151 = vsub.s32 %v148, %v150
    %v152 = vrot.slane %v145, %v151
    %v154 = vadd.f32 %v138, %v152
    %s155 = sld [smem:[#allocation8 + $0x1]]
    %v156 = vstv %s155
    %v157 = vadd.f32 %v154, %v156
    %159 = vrot.lane.b32.xlu0 %v157, 96
    %v160 = vpop.permute.xlu0 %159
    %v161 = vrot.slane %v160, 6
    %vm162 = vcmask 785408
    %v163 = vsel %vm162, %v161, %v160
    %vm165 = vcmask 1042176
    %vm166 = vcmask 1043458
    %vm167 = vmor %vm166, %vm165
    %vm168 = vcmask 521220
    %vm169 = vmor %vm168, %vm167
    %170 = vst.msk [vmem:[#allocation9 + $0x2] sm:$0x3f] %vm169, %v163
    %s171 = sld [smem:[#allocation7 + $0x100]]
    %v172 = vstv %s171
    %v173 = vmul.f32 %v172, %v50
    %s174 = sld [smem:[#allocation7 + $0x101]]
    %v175 = vstv %s174
    %v176 = vmul.f32 %v175, %v69
    %v177 = vmul.f32 %v175, %v70
    %v180 = vcombine.low %v176, %v177
    %v182 = vunpack.c.l.s4 1983009808
    %v183 = vunpack.c.0.s8 %v182
    %v184 = vlaneseq
    %v185 = vshrl.u32 %v184, 7
    %v186 = vsub.s32 %v183, %v185
    %v187 = vrot.slane %v180, %v186
    %v189 = vadd.f32 %v173, %v187
    %s190 = sld [smem:[#allocation7 + $0x102]]
    %v191 = vstv %s190
    %v192 = vmul.f32 %v191, %v76
    %v193 = vmul.f32 %v191, %v77
    %v196 = vcombine.low %v192, %v193
    %v198 = vunpack.c.l.s4 1983009808
    %v199 = vunpack.c.0.s8 %v198
    %v200 = vlaneseq
    %v201 = vshrl.u32 %v200, 7
    %v202 = vsub.s32 %v199, %v201
    %v203 = vrot.slane %v196, %v202
    %v205 = vadd.f32 %v189, %v203
    %s206 = sld [smem:[#allocation8 + $0x2]]
    %v207 = vstv %s206
    %v208 = vadd.f32 %v205, %v207
    %210 = vrot.lane.b32.xlu0 %v208, 64
    %v211 = vpop.permute.xlu0 %210
    %v212 = vrot.slane %v211, 6
    %vm213 = vcmask 523264
    %v214 = vsel %vm213, %v212, %v211
    %vm216 = vcmask 1041920
    %vm217 = vmor %vm166, %vm216
    %vm218 = vcmask 259076
    %vm219 = vmor %vm218, %vm217
    %220 = vst.msk [vmem:[#allocation9 + $0x6] sm:$0x3f] %vm219, %v214
    %s221 = sld [smem:[#allocation7 + $0x180]]
    %v222 = vstv %s221
    %v223 = vmul.f32 %v222, %v50
    %s224 = sld [smem:[#allocation7 + $0x181]]
    %v225 = vstv %s224
    %v226 = vmul.f32 %v225, %v69
    %v227 = vmul.f32 %v225, %v70
    %v230 = vcombine.low %v226, %v227
    %v232 = vunpack.c.l.s4 1983009808
    %v233 = vunpack.c.0.s8 %v232
    %v234 = vlaneseq
    %v235 = vshrl.u32 %v234, 7
    %v236 = vsub.s32 %v233, %v235
    %v237 = vrot.slane %v230, %v236
    %v239 = vadd.f32 %v223, %v237
    %s240 = sld [smem:[#allocation7 + $0x182]]
    %v241 = vstv %s240
    %v242 = vmul.f32 %v241, %v76
    %v243 = vmul.f32 %v241, %v77
    %v246 = vcombine.low %v242, %v243
    %v248 = vunpack.c.l.s4 1983009808
    %v249 = vunpack.c.0.s8 %v248
    %v250 = vlaneseq
    %v251 = vshrl.u32 %v250, 7
    %v252 = vsub.s32 %v249, %v251
    %v253 = vrot.slane %v246, %v252
    %v255 = vadd.f32 %v239, %v253
    %s256 = sld [smem:[#allocation8 + $0x3]]
    %v257 = vstv %s256
    %v258 = vadd.f32 %v255, %v257
    %260 = vrot.lane.b32.xlu0 %v258, 32
    %v261 = vpop.permute.xlu0 %260
    %v262 = vrot.slane %v261, 6
    %vm263 = vcmask 261120
    %v264 = vsel %vm263, %v262, %v261
    %vm266 = vcmask 1041664
    %vm267 = vmor %vm166, %vm266
    %268 = vst.msk [vmem:[#allocation9 + $0xa] sm:$0xf] %vm267, %v264
    // Predicated region
    $region26: #{tpu_custom_call.1} parent=1 // pred_check
      _
    $region27: #{tpu_custom_call.1} parent=1 // pred_check_branch
      %270 = sbr.rel (0) target = $region29
    $region28: #{tpu_custom_call.1} parent=1 // pred_region
      %s272 = ssub.s32 224, 224
      %273 = vsyncadd [#allocation4], %s272
      %s275 = sshll.u32 [#allocation9], 4
      %s276 = int_to_ptr.vmem [resolvable:$true] %s275
      %278 = dma.vmem_to_hbm [thread:$0]  %s276, 224, %s3, [#allocation4]
    $region29: #{tpu_custom_call.1} parent=1 // pred_fallthru
      _
    // Predicated region
    $region30: #{tpu_custom_call.1} parent=1 // pred_check
      _
    $region31: #{tpu_custom_call.1} parent=1 // pred_check_branch
      %280 = sbr.rel (0) target = $region33
    $region32: #{tpu_custom_call.1} parent=1 // pred_region
      %281 = dma.done [#allocation4], 224
    $region33: #{tpu_custom_call.1} parent=1 // pred_fallthru
      _
    %282 = vsyncpa [#allocation3], 1
    %283 = vsyncpa [#allocation4], 1
    %284 = vsyncpa [#allocation5], 1
    %285 = vsyncpa [#allocation6], 1

</llo_original>
